<compile_context>
chip_gen: v7x
topology: tpu7x:2x2x1
jax: 0.10.0
libtpu: 0.0.40
codegen_flags: <defaults>
</compile_context>

<pallas_src>
import jax
import jax.numpy as jnp
from jax.experimental import pallas as pl
from jax.experimental.pallas import tpu as pltpu

LANE = 128


def _round_up(x, m):
    return (x + m - 1) // m * m


# ----------------------------- Pallas kernel --------------------------------
def deeponet_kernel(xc_ref, w_ref, out_ref):
    """Refs:
       xc_ref : (2*B_pad + 128, 128)
                rows 0      : B_pad       -> [x1 | x2]   (fused branch input)
                rows B_pad  : 2*B_pad     -> layer-0 bias tile (lane 127 = 1)
                rows 2*B_pad: 2*B_pad+128 -> coords^T, padded, row 127 = ones
       w_ref  : (8, 128, 128)  planes 0..3 = fused-branch layers 0..3
                               planes 4..7 = trunk layers 0..3 (transposed,
                                             biases folded, last duplicated)
       out_ref: (B_pad, P_pad=128)
    """
    f32 = jnp.float32
    nb = out_ref.shape[0]                      # B_pad (static)

    x = xc_ref[pl.ds(0, nb), :]                # (B_pad, 128)
    b0 = xc_ref[pl.ds(nb, nb), :]              # (B_pad, 128)  bias0 + ones lane
    cT = xc_ref[pl.ds(2 * nb, LANE), :]        # (128, 128)    coords^T + ones row

    # ---- fused branch1+branch2 chain (block-diagonal, biases 1..3 folded) ----
    h = jnp.maximum(jnp.dot(x, w_ref[0], preferred_element_type=f32) + b0, 0.0)
    h = jnp.maximum(jnp.dot(h, w_ref[1], preferred_element_type=f32), 0.0)
    h = jnp.maximum(jnp.dot(h, w_ref[2], preferred_element_type=f32), 0.0)
    h = jnp.dot(h, w_ref[3], preferred_element_type=f32)
    # h: cols 0:4 = branch1 out, cols 4:8 = branch2 out, rest 0

    # ---- trunk chain in transposed layout (biases folded via ones row) ------
    t = jnp.maximum(jnp.dot(w_ref[4], cT, preferred_element_type=f32), 0.0)
    t = jnp.maximum(jnp.dot(w_ref[5], t, preferred_element_type=f32), 0.0)
    t = jnp.maximum(jnp.dot(w_ref[6], t, preferred_element_type=f32), 0.0)
    t = jnp.dot(w_ref[7], t, preferred_element_type=f32)
    # t: rows 0:4 = trunk out, rows 4:8 = trunk out (dup), rest 0

    # (branch1 + branch2) . trunk  ==  plain lane-dense matmul, no transpose.
    out_ref[...] = jnp.dot(h, t, preferred_element_type=f32)


# --------------------------- host-side packing --------------------------------
def _pad2(a, rows, cols):
    a = a.astype(jnp.float32)
    return jnp.pad(a, ((0, rows - a.shape[0]), (0, cols - a.shape[1])))


def _pad1(a, cols):
    a = a.astype(jnp.float32)
    return jnp.pad(a, (0, cols - a.shape[0]))


def _block_diag(a, b):
    a = a.astype(jnp.float32)
    b = b.astype(jnp.float32)
    top = jnp.concatenate([a, jnp.zeros((a.shape[0], b.shape[1]), jnp.float32)], axis=1)
    bot = jnp.concatenate([jnp.zeros((b.shape[0], a.shape[1]), jnp.float32), b], axis=1)
    return jnp.concatenate([top, bot], axis=0)


def pack_params(params):
    """ONE-TIME packing of the 24 small parameter tensors into
       (w_stack (8,128,128), b0_row (128,)). Call once per parameter set."""
    b1, b2, tr = params["branch1"], params["branch2"], params["trunk"]
    assert b1[0][0].shape[0] + b2[0][0].shape[0] <= LANE, (
        "fused first layer needs 2*P <= 128")

    planes = []

    # fused branch layer 0: block-diagonal (2P, 48) -> (128, 128). Bias is the
    # separate b0_row (also establishes the ones lane at lane 127).
    planes.append(_pad2(_block_diag(b1[0][0], b2[0][0]), LANE, LANE))

    # fused branch layers 1..3: bias folded into row 127 (read via ones lane).
    for i in (1, 2, 3):
        w = _pad2(_block_diag(b1[i][0], b2[i][0]), LANE, LANE)
        bias = _pad1(jnp.concatenate([b1[i][1], b2[i][1]]), LANE)
        w = w.at[LANE - 1, :].set(bias)
        if i < 3:                                   # keep the ones lane alive
            w = w.at[LANE - 1, LANE - 1].set(1.0)
        planes.append(w)

    # trunk layers 0..2 (transposed): bias folded into column 127 (ones row).
    for i in (0, 1, 2):
        wT = _pad2(tr[i][0].T, LANE, LANE)
        n_out = tr[i][1].shape[0]
        wT = wT.at[:n_out, LANE - 1].set(tr[i][1].astype(jnp.float32))
        wT = wT.at[LANE - 1, LANE - 1].set(1.0)     # keep the ones row alive
        planes.append(wT)

    # trunk last layer (transposed), duplicated so rows 0:4 and 4:8 both hold
    # the trunk output -> the final contraction needs no slice/add in-kernel.
    wlT = jnp.concatenate([tr[3][0].T, tr[3][0].T], axis=0)          # (8, 24)
    blT = jnp.concatenate([tr[3][1], tr[3][1]]).astype(jnp.float32)  # (8,)
    wlT = _pad2(wlT, LANE, LANE)
    wlT = wlT.at[:blT.shape[0], LANE - 1].set(blT)
    planes.append(wlT)

    w_stack = jnp.stack(planes)                                      # (8,128,128)

    # branch layer-0 bias row; lane 127 = 1 seeds the ones lane after ReLU.
    b0_row = _pad1(jnp.concatenate([b1[0][1], b2[0][1]]), LANE)
    b0_row = b0_row.at[LANE - 1].set(1.0)
    return w_stack, b0_row


# ------------------------------ wrapper --------------------------------------
@jax.jit
def deeponet_forward(input_data1, input_data2, spatial_coords, w_stack, b0_row):
    """input_data1/2: (B, 1, P), spatial_coords: (P, 3). Returns (B, P, 1)."""
    B = input_data1.shape[0]
    P = spatial_coords.shape[0]
    assert 2 * P <= LANE  # TODO(synk): for 2*P > 128 keep a separate first-layer slab + K grid axis.
    B_pad = _round_up(max(B, 8), 8)
    P_pad = LANE

    x1 = input_data1.reshape(B, P).astype(jnp.float32)
    x2 = input_data2.reshape(B, P).astype(jnp.float32)
    x = jnp.concatenate([x1, x2], axis=1)                        # (B, 2P)
    x = jnp.pad(x, ((0, B_pad - B), (0, LANE - 2 * P)))          # (B_pad, 128)

    b0_tile = jnp.broadcast_to(b0_row, (B_pad, LANE))            # (B_pad, 128)

    cT = spatial_coords.T.astype(jnp.float32)                    # (3, P)
    cT = jnp.pad(cT, ((0, LANE - 1 - cT.shape[0]), (0, P_pad - P)))
    cT = jnp.concatenate([cT, jnp.ones((1, P_pad), jnp.float32)], axis=0)

    xc = jnp.concatenate([x, b0_tile, cT], axis=0)               # (2*B_pad+128, 128)

    out = pl.pallas_call(
        deeponet_kernel,
        out_shape=jax.ShapeDtypeStruct((B_pad, P_pad), jnp.float32),
        in_specs=[pl.BlockSpec(memory_space=pltpu.MemorySpace.VMEM)] * 2,
        out_specs=pl.BlockSpec(memory_space=pltpu.MemorySpace.VMEM),
    )(xc, w_stack)

    return out[:B, :P, None]                                     # (B, P, 1)


# -------------------------- deterministic params ------------------------------
def init_linear(key, fan_in, fan_out):
    # mimic torch.nn.Linear default: U(-1/sqrt(fan_in), 1/sqrt(fan_in))
    kw, kb = jax.random.split(key)
    bound = 1.0 / jnp.sqrt(jnp.float32(fan_in))
    w = jax.random.uniform(kw, (fan_in, fan_out), jnp.float32, -bound, bound)
    b = jax.random.uniform(kb, (fan_out,), jnp.float32, -bound, bound)
    return w, b


def init_net(key, layers):
    keys = jax.random.split(key, len(layers) - 1)
    return [init_linear(k, layers[i], layers[i + 1]) for i, k in enumerate(keys)]


def reference_forward(input_data1, input_data2, spatial_coords, params):
    def mlp(x, ws):
        for i, (w, b) in enumerate(ws):
            x = x @ w + b
            if i < len(ws) - 1:
                x = jnp.maximum(x, 0.0)
        return x

    bo1 = mlp(input_data1, params["branch1"])   # (B, 1, 4)
    bo2 = mlp(input_data2, params["branch2"])   # (B, 1, 4)
    to = mlp(spatial_coords, params["trunk"])   # (P, 4)
    comb = bo1 + bo2                            # (B, 1, 4)
    return jnp.sum(comb * to, axis=2, keepdims=True)  # (B, P, 1)


if __name__ == "__main__":
    npoints = 64
    B = 2
    branch_layers1 = [npoints, 24, 24, 24, 4]
    branch_layers2 = [npoints, 24, 24, 24, 4]
    trunk_layers = [3, 24, 24, 24, 4]

    key = jax.random.PRNGKey(0)
    k_b1, k_b2, k_t, k_x1, k_x2, k_c = jax.random.split(key, 6)

    params = {
        "branch1": init_net(k_b1, branch_layers1),
        "branch2": init_net(k_b2, branch_layers2),
        "trunk": init_net(k_t, trunk_layers),
    }

    # One-time packing (hoisted out of the per-call path).
    w_stack, b0_row = pack_params(params)
    w_stack = jax.block_until_ready(w_stack)

    input_data1 = jax.random.normal(k_x1, (B, 1, npoints), jnp.float32)
    input_data2 = jax.random.normal(k_x2, (B, 1, npoints), jnp.float32)
    spatial_coords = jax.random.uniform(k_c, (npoints, 3), jnp.float32)

    out = deeponet_forward(input_data1, input_data2, spatial_coords,
                           w_stack, b0_row)
    out = jax.block_until_ready(out)

    ref = reference_forward(input_data1, input_data2, spatial_coords, params)
    assert out.shape == (B, npoints, 1), out.shape
    assert jnp.allclose(out, ref, atol=1e-5, rtol=1e-5), (
        float(jnp.max(jnp.abs(out - ref)))
    )
    print("KERNEL_OK")
</pallas_src>

<mosaic_0001>
module attributes {stable_mosaic.version = 11 : i64} {
  func.func @deeponet_kernel(%arg0: memref<144x128xf32, #tpu.memory_space<vmem>>, %arg1: memref<8x128x128xf32, #tpu.memory_space<vmem>>, %arg2: memref<8x128xf32, #tpu.memory_space<vmem>>) attributes {dimension_semantics = [], scalar_prefetch = 0 : i64, scratch_operands = 0 : i64, tpu.core_type = #tpu.core_type<tc>} {
    %c0 = arith.constant 0 : index
    %c0_0 = arith.constant 0 : index
    %0 = vector.load %arg0[%c0, %c0_0] : memref<144x128xf32, #tpu.memory_space<vmem>>, vector<8x128xf32>
    %c8 = arith.constant 8 : index
    %c0_1 = arith.constant 0 : index
    %1 = vector.load %arg0[%c8, %c0_1] : memref<144x128xf32, #tpu.memory_space<vmem>>, vector<8x128xf32>
    %c16 = arith.constant 16 : index
    %c0_2 = arith.constant 0 : index
    %2 = vector.load %arg0[%c16, %c0_2] : memref<144x128xf32, #tpu.memory_space<vmem>>, vector<128x128xf32>
    %c0_3 = arith.constant 0 : index
    %c0_4 = arith.constant 0 : index
    %c0_5 = arith.constant 0 : index
    %3 = vector.load %arg1[%c0_3, %c0_4, %c0_5] : memref<8x128x128xf32, #tpu.memory_space<vmem>>, vector<1x128x128xf32>
    %4 = vector.shape_cast %3 : vector<1x128x128xf32> to vector<128x128xf32>
    %cst = arith.constant dense<0.000000e+00> : vector<8x128xf32>
    %5 = tpu.matmul %0, %4, %cst {dimension_numbers = #tpu.dot_dimension_numbers<[1], [0], [0], [1], [0, 0, 1, 1], [], []>} : vector<8x128xf32>, vector<128x128xf32>, vector<8x128xf32> -> vector<8x128xf32>
    %6 = arith.addf %5, %1 : vector<8x128xf32>
    %cst_6 = arith.constant 0.000000e+00 : f32
    %7 = vector.broadcast %cst_6 : f32 to vector<8x128xf32>
    %8 = arith.maximumf %6, %7 : vector<8x128xf32>
    %c1 = arith.constant 1 : index
    %c0_7 = arith.constant 0 : index
    %c0_8 = arith.constant 0 : index
    %9 = vector.load %arg1[%c1, %c0_7, %c0_8] : memref<8x128x128xf32, #tpu.memory_space<vmem>>, vector<1x128x128xf32>
    %10 = vector.shape_cast %9 : vector<1x128x128xf32> to vector<128x128xf32>
    %cst_9 = arith.constant dense<0.000000e+00> : vector<8x128xf32>
    %11 = tpu.matmul %8, %10, %cst_9 {dimension_numbers = #tpu.dot_dimension_numbers<[1], [0], [0], [1], [0, 0, 1, 1], [], []>} : vector<8x128xf32>, vector<128x128xf32>, vector<8x128xf32> -> vector<8x128xf32>
    %cst_10 = arith.constant 0.000000e+00 : f32
    %12 = vector.broadcast %cst_10 : f32 to vector<8x128xf32>
    %13 = arith.maximumf %11, %12 : vector<8x128xf32>
    %c2 = arith.constant 2 : index
    %c0_11 = arith.constant 0 : index
    %c0_12 = arith.constant 0 : index
    %14 = vector.load %arg1[%c2, %c0_11, %c0_12] : memref<8x128x128xf32, #tpu.memory_space<vmem>>, vector<1x128x128xf32>
    %15 = vector.shape_cast %14 : vector<1x128x128xf32> to vector<128x128xf32>
    %cst_13 = arith.constant dense<0.000000e+00> : vector<8x128xf32>
    %16 = tpu.matmul %13, %15, %cst_13 {dimension_numbers = #tpu.dot_dimension_numbers<[1], [0], [0], [1], [0, 0, 1, 1], [], []>} : vector<8x128xf32>, vector<128x128xf32>, vector<8x128xf32> -> vector<8x128xf32>
    %cst_14 = arith.constant 0.000000e+00 : f32
    %17 = vector.broadcast %cst_14 : f32 to vector<8x128xf32>
    %18 = arith.maximumf %16, %17 : vector<8x128xf32>
    %c3 = arith.constant 3 : index
    %c0_15 = arith.constant 0 : index
    %c0_16 = arith.constant 0 : index
    %19 = vector.load %arg1[%c3, %c0_15, %c0_16] : memref<8x128x128xf32, #tpu.memory_space<vmem>>, vector<1x128x128xf32>
    %20 = vector.shape_cast %19 : vector<1x128x128xf32> to vector<128x128xf32>
    %cst_17 = arith.constant dense<0.000000e+00> : vector<8x128xf32>
    %21 = tpu.matmul %18, %20, %cst_17 {dimension_numbers = #tpu.dot_dimension_numbers<[1], [0], [0], [1], [0, 0, 1, 1], [], []>} : vector<8x128xf32>, vector<128x128xf32>, vector<8x128xf32> -> vector<8x128xf32>
    %c4 = arith.constant 4 : index
    %c0_18 = arith.constant 0 : index
    %c0_19 = arith.constant 0 : index
    %22 = vector.load %arg1[%c4, %c0_18, %c0_19] : memref<8x128x128xf32, #tpu.memory_space<vmem>>, vector<1x128x128xf32>
    %23 = vector.shape_cast %22 : vector<1x128x128xf32> to vector<128x128xf32>
    %cst_20 = arith.constant dense<0.000000e+00> : vector<128x128xf32>
    %24 = tpu.matmul %23, %2, %cst_20 {dimension_numbers = #tpu.dot_dimension_numbers<[1], [0], [0], [1], [0, 0, 1, 1], [], []>} : vector<128x128xf32>, vector<128x128xf32>, vector<128x128xf32> -> vector<128x128xf32>
    %cst_21 = arith.constant 0.000000e+00 : f32
    %25 = vector.broadcast %cst_21 : f32 to vector<128x128xf32>
    %26 = arith.maximumf %24, %25 : vector<128x128xf32>
    %c5 = arith.constant 5 : index
    %c0_22 = arith.constant 0 : index
    %c0_23 = arith.constant 0 : index
    %27 = vector.load %arg1[%c5, %c0_22, %c0_23] : memref<8x128x128xf32, #tpu.memory_space<vmem>>, vector<1x128x128xf32>
    %28 = vector.shape_cast %27 : vector<1x128x128xf32> to vector<128x128xf32>
    %cst_24 = arith.constant dense<0.000000e+00> : vector<128x128xf32>
    %29 = tpu.matmul %28, %26, %cst_24 {dimension_numbers = #tpu.dot_dimension_numbers<[1], [0], [0], [1], [0, 0, 1, 1], [], []>} : vector<128x128xf32>, vector<128x128xf32>, vector<128x128xf32> -> vector<128x128xf32>
    %cst_25 = arith.constant 0.000000e+00 : f32
    %30 = vector.broadcast %cst_25 : f32 to vector<128x128xf32>
    %31 = arith.maximumf %29, %30 : vector<128x128xf32>
    %c6 = arith.constant 6 : index
    %c0_26 = arith.constant 0 : index
    %c0_27 = arith.constant 0 : index
    %32 = vector.load %arg1[%c6, %c0_26, %c0_27] : memref<8x128x128xf32, #tpu.memory_space<vmem>>, vector<1x128x128xf32>
    %33 = vector.shape_cast %32 : vector<1x128x128xf32> to vector<128x128xf32>
    %cst_28 = arith.constant dense<0.000000e+00> : vector<128x128xf32>
    %34 = tpu.matmul %33, %31, %cst_28 {dimension_numbers = #tpu.dot_dimension_numbers<[1], [0], [0], [1], [0, 0, 1, 1], [], []>} : vector<128x128xf32>, vector<128x128xf32>, vector<128x128xf32> -> vector<128x128xf32>
    %cst_29 = arith.constant 0.000000e+00 : f32
    %35 = vector.broadcast %cst_29 : f32 to vector<128x128xf32>
    %36 = arith.maximumf %34, %35 : vector<128x128xf32>
    %c7 = arith.constant 7 : index
    %c0_30 = arith.constant 0 : index
    %c0_31 = arith.constant 0 : index
    %37 = vector.load %arg1[%c7, %c0_30, %c0_31] : memref<8x128x128xf32, #tpu.memory_space<vmem>>, vector<1x128x128xf32>
    %38 = vector.shape_cast %37 : vector<1x128x128xf32> to vector<128x128xf32>
    %cst_32 = arith.constant dense<0.000000e+00> : vector<128x128xf32>
    %39 = tpu.matmul %38, %36, %cst_32 {dimension_numbers = #tpu.dot_dimension_numbers<[1], [0], [0], [1], [0, 0, 1, 1], [], []>} : vector<128x128xf32>, vector<128x128xf32>, vector<128x128xf32> -> vector<128x128xf32>
    %cst_33 = arith.constant dense<0.000000e+00> : vector<8x128xf32>
    %40 = tpu.matmul %21, %39, %cst_33 {dimension_numbers = #tpu.dot_dimension_numbers<[1], [0], [0], [1], [0, 0, 1, 1], [], []>} : vector<8x128xf32>, vector<128x128xf32>, vector<8x128xf32> -> vector<8x128xf32>
    %c0_34 = arith.constant 0 : index
    %c0_35 = arith.constant 0 : index
    %41 = vector.load %arg2[%c0_34, %c0_35] : memref<8x128xf32, #tpu.memory_space<vmem>>, vector<8x128xf32>
    tpu.vector_store %arg2[%c0_34, %c0_35], %40 {strides = array<i32>} : memref<8x128xf32, #tpu.memory_space<vmem>>, vector<8x128xf32>,
    return
  }
}

</mosaic_0001>

<llo_original>
// kernel: deeponet_forward.1
$region0: #{deeponet_forward.1}
  #allocation0 [shape = 'u32[]', space=smem, size = 0x4, offset = 0x4, fixed_abs, tag = 'smem constant byte address 0x4 - core index']
  #allocation1 [shape = 'u32[144,128]{1,0:T(1,128)}', space=vmem, size = 0x12000, scoped, tag = 'internal scratch']
  %s0 = inlined_call_operand.vmem [shape: f32[144,128], index: 0, kind: input, shape index: {}]
  %s1 = inlined_call_operand.hbm [shape: f32[8,128,128], index: 1, kind: input, shape index: {}]
  %s2 = inlined_call_operand.vmem [shape: f32[8,128], index: 2, kind: output, shape index: {}]
  %s3 = sld [smem:[#allocation0]]
  $region22: #{deeponet_forward.1} parent=0
    _
  %s5 = ssub.s32 1, %s3
  %s6 = scalar_select 0, %s5, %s3
  $region1: #{deeponet_forward.1} parent=0
    #allocation2 [shape = 'u8[524288]{0}', space=vmem, size = 0x80000, scoped, tag = 'input window, operand 1, single buffered']
    #allocation3 [shape = 's32[1]{0}', space=sflag, size = 0x4, scoped, tag = 'scoped memory for deeponet_forward.1']
    %7 = vsyncpa [#allocation3], 0
    // Predicated region
    $region2: #{deeponet_forward.1} parent=1 // pred_check
      _
    $region3: #{deeponet_forward.1} parent=1 // pred_check_branch
      %9 = sbr.rel (0) target = $region5
    $region4: #{deeponet_forward.1} parent=1 // pred_region
      _
    $region5: #{deeponet_forward.1} parent=1 // pred_fallthru
      _
    // Predicated region
    $region6: #{deeponet_forward.1} parent=1 // pred_check
      _
    $region7: #{deeponet_forward.1} parent=1 // pred_check_branch
      %11 = sbr.rel (0) target = $region9
    $region8: #{deeponet_forward.1} parent=1 // pred_region
      %s13 = ssub.s32 16384, 16384
      %14 = vsyncadd [#allocation3], %s13
      %s15 = sshll.u32 [#allocation2], 4
      %s16 = int_to_ptr.vmem [resolvable:$true] %s15
      %21 = dma.hbm_to_vmem [thread:$0]  %s1, 16384, %s16, [#allocation3], 128, 128, 8
    $region9: #{deeponet_forward.1} parent=1 // pred_fallthru
      _
    // Predicated region
    $region10: #{deeponet_forward.1} parent=1 // pred_check
      _
    $region11: #{deeponet_forward.1} parent=1 // pred_check_branch
      %23 = sbr.rel (0) target = $region13
    $region12: #{deeponet_forward.1} parent=1 // pred_region
      %24 = dma.done [#allocation3], 16384
    $region13: #{deeponet_forward.1} parent=1 // pred_fallthru
      _
    %v25 = vld [vmem:[%s0] sm:$0xff]
    %v26 = vld [vmem:[%s0 + $0x8] sm:$0xff]
    %v27 = vld [vmem:[%s0 + $0x10] sm:$0xff]
    %v28 = vld [vmem:[%s0 + $0x18] sm:$0xff]
    %v29 = vld [vmem:[%s0 + $0x20] sm:$0xff]
    %v30 = vld [vmem:[%s0 + $0x28] sm:$0xff]
    %v31 = vld [vmem:[%s0 + $0x30] sm:$0xff]
    %v32 = vld [vmem:[%s0 + $0x38] sm:$0xff]
    %v33 = vld [vmem:[%s0 + $0x40] sm:$0xff]
    %v34 = vld [vmem:[%s0 + $0x48] sm:$0xff]
    %v35 = vld [vmem:[%s0 + $0x50] sm:$0xff]
    %v36 = vld [vmem:[%s0 + $0x58] sm:$0xff]
    %v37 = vld [vmem:[%s0 + $0x60] sm:$0xff]
    %v38 = vld [vmem:[%s0 + $0x68] sm:$0xff]
    %v39 = vld [vmem:[%s0 + $0x70] sm:$0xff]
    %v40 = vld [vmem:[%s0 + $0x78] sm:$0xff]
    %v41 = vld [vmem:[%s0 + $0x80] sm:$0xff]
    %v42 = vld [vmem:[%s0 + $0x88] sm:$0xff]
    %v43 = vld [vmem:[#allocation2] sm:$0xff]
    %v44 = vld [vmem:[#allocation2 + $0x8] sm:$0xff]
    %v45 = vld [vmem:[#allocation2 + $0x10] sm:$0xff]
    %v46 = vld [vmem:[#allocation2 + $0x18] sm:$0xff]
    %v47 = vld [vmem:[#allocation2 + $0x20] sm:$0xff]
    %v48 = vld [vmem:[#allocation2 + $0x28] sm:$0xff]
    %v49 = vld [vmem:[#allocation2 + $0x30] sm:$0xff]
    %v50 = vld [vmem:[#allocation2 + $0x38] sm:$0xff]
    %v51 = vld [vmem:[#allocation2 + $0x40] sm:$0xff]
    %v52 = vld [vmem:[#allocation2 + $0x48] sm:$0xff]
    %v53 = vld [vmem:[#allocation2 + $0x50] sm:$0xff]
    %v54 = vld [vmem:[#allocation2 + $0x58] sm:$0xff]
    %v55 = vld [vmem:[#allocation2 + $0x60] sm:$0xff]
    %v56 = vld [vmem:[#allocation2 + $0x68] sm:$0xff]
    %v57 = vld [vmem:[#allocation2 + $0x70] sm:$0xff]
    %v58 = vld [vmem:[#allocation2 + $0x78] sm:$0xff]
    %59 = vmatprep.subr.mxu0 0.0
    %60 = vmatpush1.msra.mxu0 %v43
    %61 = vmatprep.subr.mxu0 0.0
    %62 = vmatpush1.msra.mxu0 %v44
    %63 = vmatprep.subr.mxu0 0.0
    %64 = vmatpush1.msra.mxu0 %v45
    %65 = vmatprep.subr.mxu0 0.0
    %66 = vmatpush1.msra.mxu0 %v46
    %67 = vmatprep.subr.mxu0 0.0
    %68 = vmatpush1.msra.mxu0 %v47
    %69 = vmatprep.subr.mxu0 0.0
    %70 = vmatpush1.msra.mxu0 %v48
    %71 = vmatprep.subr.mxu0 0.0
    %72 = vmatpush1.msra.mxu0 %v49
    %73 = vmatprep.subr.mxu0 0.0
    %74 = vmatpush1.msra.mxu0 %v50
    %75 = vmatprep.subr.mxu0 0.0
    %76 = vmatpush1.msra.mxu0 %v51
    %77 = vmatprep.subr.mxu0 0.0
    %78 = vmatpush1.msra.mxu0 %v52
    %79 = vmatprep.subr.mxu0 0.0
    %80 = vmatpush1.msra.mxu0 %v53
    %81 = vmatprep.subr.mxu0 0.0
    %82 = vmatpush1.msra.mxu0 %v54
    %83 = vmatprep.subr.mxu0 0.0
    %84 = vmatpush1.msra.mxu0 %v55
    %85 = vmatprep.subr.mxu0 0.0
    %86 = vmatpush1.msra.mxu0 %v56
    %87 = vmatprep.subr.mxu0 0.0
    %88 = vmatpush1.msra.mxu0 %v57
    %89 = vmatprep.subr.mxu0 0.0
    %90 = vmatpush1.msra.mxu0 %v58
    %91 = vmatprep.subr.mxu0 0.0
    %92 = vmatpush1.msra.mxu0 0.0
    %93 = vmatprep.subr.mxu0 0.0
    %94 = vmatpush1.msra.mxu0 0.0
    %95 = vmatprep.subr.mxu0 0.0
    %96 = vmatpush1.msra.mxu0 0.0
    %97 = vmatprep.subr.mxu0 0.0
    %98 = vmatpush1.msra.mxu0 0.0
    %99 = vmatprep.subr.mxu0 0.0
    %100 = vmatpush1.msra.mxu0 0.0
    %101 = vmatprep.subr.mxu0 0.0
    %102 = vmatpush1.msra.mxu0 0.0
    %103 = vmatprep.subr.mxu0 0.0
    %104 = vmatpush1.msra.mxu0 0.0
    %105 = vmatprep.subr.mxu0 0.0
    %106 = vmatpush1.msra.mxu0 0.0
    %107 = vmatprep.subr.mxu0 0.0
    %108 = vmatpush1.msra.mxu0 0.0
    %109 = vmatprep.subr.mxu0 0.0
    %110 = vmatpush1.msra.mxu0 0.0
    %111 = vmatprep.subr.mxu0 0.0
    %112 = vmatpush1.msra.mxu0 0.0
    %113 = vmatprep.subr.mxu0 0.0
    %114 = vmatpush1.msra.mxu0 0.0
    %115 = vmatprep.subr.mxu0 0.0
    %116 = vmatpush1.msra.mxu0 0.0
    %117 = vmatprep.subr.mxu0 0.0
    %118 = vmatpush1.msra.mxu0 0.0
    %119 = vmatprep.subr.mxu0 0.0
    %120 = vmatpush1.msra.mxu0 0.0
    %121 = vmatprep.subr.mxu0 0.0
    %122 = vmatpush1.msra.mxu0 0.0
    %123 = vmatprep.mubr.f32.mxu0 0.0
    %124 = vmatmul.mubr.f32.gmra.mrb[0].mxu0 %v25
    %v125 = vpop.f32.mrb[0].mxu0
    %v126 = vadd.f32 %v26, %v125
    %v127 = vpop.f32.mrb[0].mxu0
    %128 = vdwg.mxu0
    %v129 = vmax.f32 %v126, 0.0
    %s130 = scalar_lea.vmem [#allocation2], 128
    %v131 = vld [vmem:[%s130] sm:$0xff]
    %v132 = vld [vmem:[%s130 + $0x8] sm:$0xff]
    %v133 = vld [vmem:[%s130 + $0x10] sm:$0xff]
    %v134 = vld [vmem:[%s130 + $0x18] sm:$0xff]
    %v135 = vld [vmem:[%s130 + $0x20] sm:$0xff]
    %v136 = vld [vmem:[%s130 + $0x28] sm:$0xff]
    %v137 = vld [vmem:[%s130 + $0x30] sm:$0xff]
    %v138 = vld [vmem:[%s130 + $0x38] sm:$0xff]
    %v139 = vld [vmem:[%s130 + $0x40] sm:$0xff]
    %v140 = vld [vmem:[%s130 + $0x48] sm:$0xff]
    %v141 = vld [vmem:[%s130 + $0x50] sm:$0xff]
    %v142 = vld [vmem:[%s130 + $0x58] sm:$0xff]
    %v143 = vld [vmem:[%s130 + $0x60] sm:$0xff]
    %v144 = vld [vmem:[%s130 + $0x68] sm:$0xff]
    %v145 = vld [vmem:[%s130 + $0x70] sm:$0xff]
    %v146 = vld [vmem:[%s130 + $0x78] sm:$0xff]
    %147 = vmatprep.subr.mxu0 0.0
    %148 = vmatpush1.msra.mxu0 %v131
    %149 = vmatprep.subr.mxu0 0.0
    %150 = vmatpush1.msra.mxu0 %v132
    %151 = vmatprep.subr.mxu0 0.0
    %152 = vmatpush1.msra.mxu0 %v133
    %153 = vmatprep.subr.mxu0 0.0
    %154 = vmatpush1.msra.mxu0 %v134
    %155 = vmatprep.subr.mxu0 0.0
    %156 = vmatpush1.msra.mxu0 %v135
    %157 = vmatprep.subr.mxu0 0.0
    %158 = vmatpush1.msra.mxu0 %v136
    %159 = vmatprep.subr.mxu0 0.0
    %160 = vmatpush1.msra.mxu0 %v137
    %161 = vmatprep.subr.mxu0 0.0
    %162 = vmatpush1.msra.mxu0 %v138
    %163 = vmatprep.subr.mxu0 0.0
    %164 = vmatpush1.msra.mxu0 %v139
    %165 = vmatprep.subr.mxu0 0.0
    %166 = vmatpush1.msra.mxu0 %v140
    %167 = vmatprep.subr.mxu0 0.0
    %168 = vmatpush1.msra.mxu0 %v141
    %169 = vmatprep.subr.mxu0 0.0
    %170 = vmatpush1.msra.mxu0 %v142
    %171 = vmatprep.subr.mxu0 0.0
    %172 = vmatpush1.msra.mxu0 %v143
    %173 = vmatprep.subr.mxu0 0.0
    %174 = vmatpush1.msra.mxu0 %v144
    %175 = vmatprep.subr.mxu0 0.0
    %176 = vmatpush1.msra.mxu0 %v145
    %177 = vmatprep.subr.mxu0 0.0
    %178 = vmatpush1.msra.mxu0 %v146
    %179 = vmatprep.subr.mxu0 0.0
    %180 = vmatpush1.msra.mxu0 0.0
    %181 = vmatprep.subr.mxu0 0.0
    %182 = vmatpush1.msra.mxu0 0.0
    %183 = vmatprep.subr.mxu0 0.0
    %184 = vmatpush1.msra.mxu0 0.0
    %185 = vmatprep.subr.mxu0 0.0
    %186 = vmatpush1.msra.mxu0 0.0
    %187 = vmatprep.subr.mxu0 0.0
    %188 = vmatpush1.msra.mxu0 0.0
    %189 = vmatprep.subr.mxu0 0.0
    %190 = vmatpush1.msra.mxu0 0.0
    %191 = vmatprep.subr.mxu0 0.0
    %192 = vmatpush1.msra.mxu0 0.0
    %193 = vmatprep.subr.mxu0 0.0
    %194 = vmatpush1.msra.mxu0 0.0
    %195 = vmatprep.subr.mxu0 0.0
    %196 = vmatpush1.msra.mxu0 0.0
    %197 = vmatprep.subr.mxu0 0.0
    %198 = vmatpush1.msra.mxu0 0.0
    %199 = vmatprep.subr.mxu0 0.0
    %200 = vmatpush1.msra.mxu0 0.0
    %201 = vmatprep.subr.mxu0 0.0
    %202 = vmatpush1.msra.mxu0 0.0
    %203 = vmatprep.subr.mxu0 0.0
    %204 = vmatpush1.msra.mxu0 0.0
    %205 = vmatprep.subr.mxu0 0.0
    %206 = vmatpush1.msra.mxu0 0.0
    %207 = vmatprep.subr.mxu0 0.0
    %208 = vmatpush1.msra.mxu0 0.0
    %209 = vmatprep.subr.mxu0 0.0
    %210 = vmatpush1.msra.mxu0 0.0
    %211 = vmatprep.mubr.f32.mxu0 0.0
    %212 = vmatmul.mubr.f32.gmra.mrb[0].mxu0 %v129
    %v213 = vpop.f32.mrb[0].mxu0
    %v214 = vadd.f32 0.0, %v213
    %v215 = vpop.f32.mrb[0].mxu0
    %216 = vdwg.mxu0
    %v217 = vmax.f32 %v214, 0.0
    %s218 = scalar_lea.vmem [#allocation2], 256
    %v219 = vld [vmem:[%s218] sm:$0xff]
    %v220 = vld [vmem:[%s218 + $0x8] sm:$0xff]
    %v221 = vld [vmem:[%s218 + $0x10] sm:$0xff]
    %v222 = vld [vmem:[%s218 + $0x18] sm:$0xff]
    %v223 = vld [vmem:[%s218 + $0x20] sm:$0xff]
    %v224 = vld [vmem:[%s218 + $0x28] sm:$0xff]
    %v225 = vld [vmem:[%s218 + $0x30] sm:$0xff]
    %v226 = vld [vmem:[%s218 + $0x38] sm:$0xff]
    %v227 = vld [vmem:[%s218 + $0x40] sm:$0xff]
    %v228 = vld [vmem:[%s218 + $0x48] sm:$0xff]
    %v229 = vld [vmem:[%s218 + $0x50] sm:$0xff]
    %v230 = vld [vmem:[%s218 + $0x58] sm:$0xff]
    %v231 = vld [vmem:[%s218 + $0x60] sm:$0xff]
    %v232 = vld [vmem:[%s218 + $0x68] sm:$0xff]
    %v233 = vld [vmem:[%s218 + $0x70] sm:$0xff]
    %v234 = vld [vmem:[%s218 + $0x78] sm:$0xff]
    %235 = vmatprep.subr.mxu0 0.0
    %236 = vmatpush1.msra.mxu0 %v219
    %237 = vmatprep.subr.mxu0 0.0
    %238 = vmatpush1.msra.mxu0 %v220
    %239 = vmatprep.subr.mxu0 0.0
    %240 = vmatpush1.msra.mxu0 %v221
    %241 = vmatprep.subr.mxu0 0.0
    %242 = vmatpush1.msra.mxu0 %v222
    %243 = vmatprep.subr.mxu0 0.0
    %244 = vmatpush1.msra.mxu0 %v223
    %245 = vmatprep.subr.mxu0 0.0
    %246 = vmatpush1.msra.mxu0 %v224
    %247 = vmatprep.subr.mxu0 0.0
    %248 = vmatpush1.msra.mxu0 %v225
    %249 = vmatprep.subr.mxu0 0.0
    %250 = vmatpush1.msra.mxu0 %v226
    %251 = vmatprep.subr.mxu0 0.0
    %252 = vmatpush1.msra.mxu0 %v227
    %253 = vmatprep.subr.mxu0 0.0
    %254 = vmatpush1.msra.mxu0 %v228
    %255 = vmatprep.subr.mxu0 0.0
    %256 = vmatpush1.msra.mxu0 %v229
    %257 = vmatprep.subr.mxu0 0.0
    %258 = vmatpush1.msra.mxu0 %v230
    %259 = vmatprep.subr.mxu0 0.0
    %260 = vmatpush1.msra.mxu0 %v231
    %261 = vmatprep.subr.mxu0 0.0
    %262 = vmatpush1.msra.mxu0 %v232
    %263 = vmatprep.subr.mxu0 0.0
    %264 = vmatpush1.msra.mxu0 %v233
    %265 = vmatprep.subr.mxu0 0.0
    %266 = vmatpush1.msra.mxu0 %v234
    %267 = vmatprep.subr.mxu0 0.0
    %268 = vmatpush1.msra.mxu0 0.0
    %269 = vmatprep.subr.mxu0 0.0
    %270 = vmatpush1.msra.mxu0 0.0
    %271 = vmatprep.subr.mxu0 0.0
    %272 = vmatpush1.msra.mxu0 0.0
    %273 = vmatprep.subr.mxu0 0.0
    %274 = vmatpush1.msra.mxu0 0.0
    %275 = vmatprep.subr.mxu0 0.0
    %276 = vmatpush1.msra.mxu0 0.0
    %277 = vmatprep.subr.mxu0 0.0
    %278 = vmatpush1.msra.mxu0 0.0
    %279 = vmatprep.subr.mxu0 0.0
    %280 = vmatpush1.msra.mxu0 0.0
    %281 = vmatprep.subr.mxu0 0.0
    %282 = vmatpush1.msra.mxu0 0.0
    %283 = vmatprep.subr.mxu0 0.0
    %284 = vmatpush1.msra.mxu0 0.0
    %285 = vmatprep.subr.mxu0 0.0
    %286 = vmatpush1.msra.mxu0 0.0
    %287 = vmatprep.subr.mxu0 0.0
    %288 = vmatpush1.msra.mxu0 0.0
    %289 = vmatprep.subr.mxu0 0.0
    %290 = vmatpush1.msra.mxu0 0.0
    %291 = vmatprep.subr.mxu0 0.0
    %292 = vmatpush1.msra.mxu0 0.0
    %293 = vmatprep.subr.mxu0 0.0
    %294 = vmatpush1.msra.mxu0 0.0
    %295 = vmatprep.subr.mxu0 0.0
    %296 = vmatpush1.msra.mxu0 0.0
    %297 = vmatprep.subr.mxu0 0.0
    %298 = vmatpush1.msra.mxu0 0.0
    %299 = vmatprep.mubr.f32.mxu0 0.0
    %300 = vmatmul.mubr.f32.gmra.mrb[0].mxu0 %v217
    %v301 = vpop.f32.mrb[0].mxu0
    %v302 = vadd.f32 0.0, %v301
    %v303 = vpop.f32.mrb[0].mxu0
    %304 = vdwg.mxu0
    %v305 = vmax.f32 %v302, 0.0
    %s306 = scalar_lea.vmem [#allocation2], 384
    %v307 = vld [vmem:[%s306] sm:$0xff]
    %v308 = vld [vmem:[%s306 + $0x8] sm:$0xff]
    %v309 = vld [vmem:[%s306 + $0x10] sm:$0xff]
    %v310 = vld [vmem:[%s306 + $0x18] sm:$0xff]
    %v311 = vld [vmem:[%s306 + $0x20] sm:$0xff]
    %v312 = vld [vmem:[%s306 + $0x28] sm:$0xff]
    %v313 = vld [vmem:[%s306 + $0x30] sm:$0xff]
    %v314 = vld [vmem:[%s306 + $0x38] sm:$0xff]
    %v315 = vld [vmem:[%s306 + $0x40] sm:$0xff]
    %v316 = vld [vmem:[%s306 + $0x48] sm:$0xff]
    %v317 = vld [vmem:[%s306 + $0x50] sm:$0xff]
    %v318 = vld [vmem:[%s306 + $0x58] sm:$0xff]
    %v319 = vld [vmem:[%s306 + $0x60] sm:$0xff]
    %v320 = vld [vmem:[%s306 + $0x68] sm:$0xff]
    %v321 = vld [vmem:[%s306 + $0x70] sm:$0xff]
    %v322 = vld [vmem:[%s306 + $0x78] sm:$0xff]
    %323 = vmatprep.subr.mxu0 0.0
    %324 = vmatpush1.msra.mxu0 %v307
    %325 = vmatprep.subr.mxu0 0.0
    %326 = vmatpush1.msra.mxu0 %v308
    %327 = vmatprep.subr.mxu0 0.0
    %328 = vmatpush1.msra.mxu0 %v309
    %329 = vmatprep.subr.mxu0 0.0
    %330 = vmatpush1.msra.mxu0 %v310
    %331 = vmatprep.subr.mxu0 0.0
    %332 = vmatpush1.msra.mxu0 %v311
    %333 = vmatprep.subr.mxu0 0.0
    %334 = vmatpush1.msra.mxu0 %v312
    %335 = vmatprep.subr.mxu0 0.0
    %336 = vmatpush1.msra.mxu0 %v313
    %337 = vmatprep.subr.mxu0 0.0
    %338 = vmatpush1.msra.mxu0 %v314
    %339 = vmatprep.subr.mxu0 0.0
    %340 = vmatpush1.msra.mxu0 %v315
    %341 = vmatprep.subr.mxu0 0.0
    %342 = vmatpush1.msra.mxu0 %v316
    %343 = vmatprep.subr.mxu0 0.0
    %344 = vmatpush1.msra.mxu0 %v317
    %345 = vmatprep.subr.mxu0 0.0
    %346 = vmatpush1.msra.mxu0 %v318
    %347 = vmatprep.subr.mxu0 0.0
    %348 = vmatpush1.msra.mxu0 %v319
    %349 = vmatprep.subr.mxu0 0.0
    %350 = vmatpush1.msra.mxu0 %v320
    %351 = vmatprep.subr.mxu0 0.0
    %352 = vmatpush1.msra.mxu0 %v321
    %353 = vmatprep.subr.mxu0 0.0
    %354 = vmatpush1.msra.mxu0 %v322
    %355 = vmatprep.subr.mxu0 0.0
    %356 = vmatpush1.msra.mxu0 0.0
    %357 = vmatprep.subr.mxu0 0.0
    %358 = vmatpush1.msra.mxu0 0.0
    %359 = vmatprep.subr.mxu0 0.0
    %360 = vmatpush1.msra.mxu0 0.0
    %361 = vmatprep.subr.mxu0 0.0
    %362 = vmatpush1.msra.mxu0 0.0
    %363 = vmatprep.subr.mxu0 0.0
    %364 = vmatpush1.msra.mxu0 0.0
    %365 = vmatprep.subr.mxu0 0.0
    %366 = vmatpush1.msra.mxu0 0.0
    %367 = vmatprep.subr.mxu0 0.0
    %368 = vmatpush1.msra.mxu0 0.0
    %369 = vmatprep.subr.mxu0 0.0
    %370 = vmatpush1.msra.mxu0 0.0
    %371 = vmatprep.subr.mxu0 0.0
    %372 = vmatpush1.msra.mxu0 0.0
    %373 = vmatprep.subr.mxu0 0.0
    %374 = vmatpush1.msra.mxu0 0.0
    %375 = vmatprep.subr.mxu0 0.0
    %376 = vmatpush1.msra.mxu0 0.0
    %377 = vmatprep.subr.mxu0 0.0
    %378 = vmatpush1.msra.mxu0 0.0
    %379 = vmatprep.subr.mxu0 0.0
    %380 = vmatpush1.msra.mxu0 0.0
    %381 = vmatprep.subr.mxu0 0.0
    %382 = vmatpush1.msra.mxu0 0.0
    %383 = vmatprep.subr.mxu0 0.0
    %384 = vmatpush1.msra.mxu0 0.0
    %385 = vmatprep.subr.mxu0 0.0
    %386 = vmatpush1.msra.mxu0 0.0
    %387 = vmatprep.mubr.f32.mxu0 0.0
    %388 = vmatmul.mubr.f32.gmra.mrb[0].mxu0 %v305
    %v389 = vpop.f32.mrb[0].mxu0
    %v390 = vadd.f32 0.0, %v389
    %v391 = vpop.f32.mrb[0].mxu0
    %392 = vdwg.mxu0
    %s393 = scalar_lea.vmem [#allocation2], 512
    %v394 = vld [vmem:[%s393] sm:$0xff]
    %v395 = vld [vmem:[%s393 + $0x8] sm:$0xff]
    %v396 = vld [vmem:[%s393 + $0x10] sm:$0xff]
    %v397 = vld [vmem:[%s393 + $0x18] sm:$0xff]
    %v398 = vld [vmem:[%s393 + $0x20] sm:$0xff]
    %v399 = vld [vmem:[%s393 + $0x28] sm:$0xff]
    %v400 = vld [vmem:[%s393 + $0x30] sm:$0xff]
    %v401 = vld [vmem:[%s393 + $0x38] sm:$0xff]
    %v402 = vld [vmem:[%s393 + $0x40] sm:$0xff]
    %v403 = vld [vmem:[%s393 + $0x48] sm:$0xff]
    %v404 = vld [vmem:[%s393 + $0x50] sm:$0xff]
    %v405 = vld [vmem:[%s393 + $0x58] sm:$0xff]
    %v406 = vld [vmem:[%s393 + $0x60] sm:$0xff]
    %v407 = vld [vmem:[%s393 + $0x68] sm:$0xff]
    %v408 = vld [vmem:[%s393 + $0x70] sm:$0xff]
    %v409 = vld [vmem:[%s393 + $0x78] sm:$0xff]
    %410 = vmatprep.subr.mxu0 0.0
    %411 = vmatpush1.msra.mxu0 %v27
    %412 = vmatprep.subr.mxu0 0.0
    %413 = vmatpush1.msra.mxu0 %v28
    %414 = vmatprep.subr.mxu0 0.0
    %415 = vmatpush1.msra.mxu0 %v29
    %416 = vmatprep.subr.mxu0 0.0
    %417 = vmatpush1.msra.mxu0 %v30
    %418 = vmatprep.subr.mxu0 0.0
    %419 = vmatpush1.msra.mxu0 %v31
    %420 = vmatprep.subr.mxu0 0.0
    %421 = vmatpush1.msra.mxu0 %v32
    %422 = vmatprep.subr.mxu0 0.0
    %423 = vmatpush1.msra.mxu0 %v33
    %424 = vmatprep.subr.mxu0 0.0
    %425 = vmatpush1.msra.mxu0 %v34
    %426 = vmatprep.subr.mxu0 0.0
    %427 = vmatpush1.msra.mxu0 %v35
    %428 = vmatprep.subr.mxu0 0.0
    %429 = vmatpush1.msra.mxu0 %v36
    %430 = vmatprep.subr.mxu0 0.0
    %431 = vmatpush1.msra.mxu0 %v37
    %432 = vmatprep.subr.mxu0 0.0
    %433 = vmatpush1.msra.mxu0 %v38
    %434 = vmatprep.subr.mxu0 0.0
    %435 = vmatpush1.msra.mxu0 %v39
    %436 = vmatprep.subr.mxu0 0.0
    %437 = vmatpush1.msra.mxu0 %v40
    %438 = vmatprep.subr.mxu0 0.0
    %439 = vmatpush1.msra.mxu0 %v41
    %440 = vmatprep.subr.mxu0 0.0
    %441 = vmatpush1.msra.mxu0 %v42
    %442 = vmatprep.subr.mxu0 0.0
    %443 = vmatpush1.msra.mxu0 0.0
    %444 = vmatprep.subr.mxu0 0.0
    %445 = vmatpush1.msra.mxu0 0.0
    %446 = vmatprep.subr.mxu0 0.0
    %447 = vmatpush1.msra.mxu0 0.0
    %448 = vmatprep.subr.mxu0 0.0
    %449 = vmatpush1.msra.mxu0 0.0
    %450 = vmatprep.subr.mxu0 0.0
    %451 = vmatpush1.msra.mxu0 0.0
    %452 = vmatprep.subr.mxu0 0.0
    %453 = vmatpush1.msra.mxu0 0.0
    %454 = vmatprep.subr.mxu0 0.0
    %455 = vmatpush1.msra.mxu0 0.0
    %456 = vmatprep.subr.mxu0 0.0
    %457 = vmatpush1.msra.mxu0 0.0
    %458 = vmatprep.subr.mxu0 0.0
    %459 = vmatpush1.msra.mxu0 0.0
    %460 = vmatprep.subr.mxu0 0.0
    %461 = vmatpush1.msra.mxu0 0.0
    %462 = vmatprep.subr.mxu0 0.0
    %463 = vmatpush1.msra.mxu0 0.0
    %464 = vmatprep.subr.mxu0 0.0
    %465 = vmatpush1.msra.mxu0 0.0
    %466 = vmatprep.subr.mxu0 0.0
    %467 = vmatpush1.msra.mxu0 0.0
    %468 = vmatprep.subr.mxu0 0.0
    %469 = vmatpush1.msra.mxu0 0.0
    %470 = vmatprep.subr.mxu0 0.0
    %471 = vmatpush1.msra.mxu0 0.0
    %472 = vmatprep.subr.mxu0 0.0
    %473 = vmatpush1.msra.mxu0 0.0
    %474 = vmatprep.mubr.f32.mxu0 0.0
    %475 = vmatmul.mubr.f32.gmra.mrb[0].mxu0 %v394
    %v476 = vpop.f32.mrb[0].mxu0
    %v477 = vadd.f32 0.0, %v476
    %v478 = vpop.f32.mrb[0].mxu0
    %479 = vmatprep.mubr.f32.mxu0 0.0
    %480 = vmatmul.mubr.f32.gmra.mrb[0].mxu0 %v395
    %v481 = vpop.f32.mrb[0].mxu0
    %v482 = vadd.f32 0.0, %v481
    %v483 = vpop.f32.mrb[0].mxu0
    %484 = vmatprep.mubr.f32.mxu0 0.0
    %485 = vmatmul.mubr.f32.gmra.mrb[0].mxu0 %v396
    %v486 = vpop.f32.mrb[0].mxu0
    %v487 = vadd.f32 0.0, %v486
    %v488 = vpop.f32.mrb[0].mxu0
    %489 = vmatprep.mubr.f32.mxu0 0.0
    %490 = vmatmul.mubr.f32.gmra.mrb[0].mxu0 %v397
    %v491 = vpop.f32.mrb[0].mxu0
    %v492 = vadd.f32 0.0, %v491
    %v493 = vpop.f32.mrb[0].mxu0
    %494 = vmatprep.mubr.f32.mxu0 0.0
    %495 = vmatmul.mubr.f32.gmra.mrb[0].mxu0 %v398
    %v496 = vpop.f32.mrb[0].mxu0
    %v497 = vadd.f32 0.0, %v496
    %v498 = vpop.f32.mrb[0].mxu0
    %499 = vmatprep.mubr.f32.mxu0 0.0
    %500 = vmatmul.mubr.f32.gmra.mrb[0].mxu0 %v399
    %v501 = vpop.f32.mrb[0].mxu0
    %v502 = vadd.f32 0.0, %v501
    %v503 = vpop.f32.mrb[0].mxu0
    %504 = vmatprep.mubr.f32.mxu0 0.0
    %505 = vmatmul.mubr.f32.gmra.mrb[0].mxu0 %v400
    %v506 = vpop.f32.mrb[0].mxu0
    %v507 = vadd.f32 0.0, %v506
    %v508 = vpop.f32.mrb[0].mxu0
    %509 = vmatprep.mubr.f32.mxu0 0.0
    %510 = vmatmul.mubr.f32.gmra.mrb[0].mxu0 %v401
    %v511 = vpop.f32.mrb[0].mxu0
    %v512 = vadd.f32 0.0, %v511
    %v513 = vpop.f32.mrb[0].mxu0
    %514 = vmatprep.mubr.f32.mxu0 0.0
    %515 = vmatmul.mubr.f32.gmra.mrb[0].mxu0 %v402
    %v516 = vpop.f32.mrb[0].mxu0
    %v517 = vadd.f32 0.0, %v516
    %v518 = vpop.f32.mrb[0].mxu0
    %519 = vmatprep.mubr.f32.mxu0 0.0
    %520 = vmatmul.mubr.f32.gmra.mrb[0].mxu0 %v403
    %v521 = vpop.f32.mrb[0].mxu0
    %v522 = vadd.f32 0.0, %v521
    %v523 = vpop.f32.mrb[0].mxu0
    %524 = vmatprep.mubr.f32.mxu0 0.0
    %525 = vmatmul.mubr.f32.gmra.mrb[0].mxu0 %v404
    %v526 = vpop.f32.mrb[0].mxu0
    %v527 = vadd.f32 0.0, %v526
    %v528 = vpop.f32.mrb[0].mxu0
    %529 = vmatprep.mubr.f32.mxu0 0.0
    %530 = vmatmul.mubr.f32.gmra.mrb[0].mxu0 %v405
    %v531 = vpop.f32.mrb[0].mxu0
    %v532 = vadd.f32 0.0, %v531
    %v533 = vpop.f32.mrb[0].mxu0
    %534 = vmatprep.mubr.f32.mxu0 0.0
    %535 = vmatmul.mubr.f32.gmra.mrb[0].mxu0 %v406
    %v536 = vpop.f32.mrb[0].mxu0
    %v537 = vadd.f32 0.0, %v536
    %v538 = vpop.f32.mrb[0].mxu0
    %539 = vmatprep.mubr.f32.mxu0 0.0
    %540 = vmatmul.mubr.f32.gmra.mrb[0].mxu0 %v407
    %v541 = vpop.f32.mrb[0].mxu0
    %v542 = vadd.f32 0.0, %v541
    %v543 = vpop.f32.mrb[0].mxu0
    %544 = vmatprep.mubr.f32.mxu0 0.0
    %545 = vmatmul.mubr.f32.gmra.mrb[0].mxu0 %v408
    %v546 = vpop.f32.mrb[0].mxu0
    %v547 = vadd.f32 0.0, %v546
    %v548 = vpop.f32.mrb[0].mxu0
    %549 = vmatprep.mubr.f32.mxu0 0.0
    %550 = vmatmul.mubr.f32.gmra.mrb[0].mxu0 %v409
    %v551 = vpop.f32.mrb[0].mxu0
    %v552 = vadd.f32 0.0, %v551
    %v553 = vpop.f32.mrb[0].mxu0
    %554 = vdwg.mxu0
    %v555 = vmax.f32 %v477, 0.0
    %v556 = vmax.f32 %v482, 0.0
    %v557 = vmax.f32 %v487, 0.0
    %v558 = vmax.f32 %v492, 0.0
    %v559 = vmax.f32 %v497, 0.0
    %v560 = vmax.f32 %v502, 0.0
    %v561 = vmax.f32 %v507, 0.0
    %v562 = vmax.f32 %v512, 0.0
    %v563 = vmax.f32 %v517, 0.0
    %v564 = vmax.f32 %v522, 0.0
    %v565 = vmax.f32 %v527, 0.0
    %v566 = vmax.f32 %v532, 0.0
    %v567 = vmax.f32 %v537, 0.0
    %v568 = vmax.f32 %v542, 0.0
    %v569 = vmax.f32 %v547, 0.0
    %v570 = vmax.f32 %v552, 0.0
    %s571 = scalar_lea.vmem [#allocation2], 640
    %v572 = vld [vmem:[%s571] sm:$0xff]
    %v573 = vld [vmem:[%s571 + $0x8] sm:$0xff]
    %v574 = vld [vmem:[%s571 + $0x10] sm:$0xff]
    %v575 = vld [vmem:[%s571 + $0x18] sm:$0xff]
    %v576 = vld [vmem:[%s571 + $0x20] sm:$0xff]
    %v577 = vld [vmem:[%s571 + $0x28] sm:$0xff]
    %v578 = vld [vmem:[%s571 + $0x30] sm:$0xff]
    %v579 = vld [vmem:[%s571 + $0x38] sm:$0xff]
    %v580 = vld [vmem:[%s571 + $0x40] sm:$0xff]
    %v581 = vld [vmem:[%s571 + $0x48] sm:$0xff]
    %v582 = vld [vmem:[%s571 + $0x50] sm:$0xff]
    %v583 = vld [vmem:[%s571 + $0x58] sm:$0xff]
    %v584 = vld [vmem:[%s571 + $0x60] sm:$0xff]
    %v585 = vld [vmem:[%s571 + $0x68] sm:$0xff]
    %v586 = vld [vmem:[%s571 + $0x70] sm:$0xff]
    %v587 = vld [vmem:[%s571 + $0x78] sm:$0xff]
    %588 = vmatprep.subr.mxu0 0.0
    %589 = vmatpush1.msra.mxu0 %v555
    %590 = vmatprep.subr.mxu0 0.0
    %591 = vmatpush1.msra.mxu0 %v556
    %592 = vmatprep.subr.mxu0 0.0
    %593 = vmatpush1.msra.mxu0 %v557
    %594 = vmatprep.subr.mxu0 0.0
    %595 = vmatpush1.msra.mxu0 %v558
    %596 = vmatprep.subr.mxu0 0.0
    %597 = vmatpush1.msra.mxu0 %v559
    %598 = vmatprep.subr.mxu0 0.0
    %599 = vmatpush1.msra.mxu0 %v560
    %600 = vmatprep.subr.mxu0 0.0
    %601 = vmatpush1.msra.mxu0 %v561
    %602 = vmatprep.subr.mxu0 0.0
    %603 = vmatpush1.msra.mxu0 %v562
    %604 = vmatprep.subr.mxu0 0.0
    %605 = vmatpush1.msra.mxu0 %v563
    %606 = vmatprep.subr.mxu0 0.0
    %607 = vmatpush1.msra.mxu0 %v564
    %608 = vmatprep.subr.mxu0 0.0
    %609 = vmatpush1.msra.mxu0 %v565
    %610 = vmatprep.subr.mxu0 0.0
    %611 = vmatpush1.msra.mxu0 %v566
    %612 = vmatprep.subr.mxu0 0.0
    %613 = vmatpush1.msra.mxu0 %v567
    %614 = vmatprep.subr.mxu0 0.0
    %615 = vmatpush1.msra.mxu0 %v568
    %616 = vmatprep.subr.mxu0 0.0
    %617 = vmatpush1.msra.mxu0 %v569
    %618 = vmatprep.subr.mxu0 0.0
    %619 = vmatpush1.msra.mxu0 %v570
    %620 = vmatprep.subr.mxu0 0.0
    %621 = vmatpush1.msra.mxu0 0.0
    %622 = vmatprep.subr.mxu0 0.0
    %623 = vmatpush1.msra.mxu0 0.0
    %624 = vmatprep.subr.mxu0 0.0
    %625 = vmatpush1.msra.mxu0 0.0
    %626 = vmatprep.subr.mxu0 0.0
    %627 = vmatpush1.msra.mxu0 0.0
    %628 = vmatprep.subr.mxu0 0.0
    %629 = vmatpush1.msra.mxu0 0.0
    %630 = vmatprep.subr.mxu0 0.0
    %631 = vmatpush1.msra.mxu0 0.0
    %632 = vmatprep.subr.mxu0 0.0
    %633 = vmatpush1.msra.mxu0 0.0
    %634 = vmatprep.subr.mxu0 0.0
    %635 = vmatpush1.msra.mxu0 0.0
    %636 = vmatprep.subr.mxu0 0.0
    %637 = vmatpush1.msra.mxu0 0.0
    %638 = vmatprep.subr.mxu0 0.0
    %639 = vmatpush1.msra.mxu0 0.0
    %640 = vmatprep.subr.mxu0 0.0
    %641 = vmatpush1.msra.mxu0 0.0
    %642 = vmatprep.subr.mxu0 0.0
    %643 = vmatpush1.msra.mxu0 0.0
    %644 = vmatprep.subr.mxu0 0.0
    %645 = vmatpush1.msra.mxu0 0.0
    %646 = vmatprep.subr.mxu0 0.0
    %647 = vmatpush1.msra.mxu0 0.0
    %648 = vmatprep.subr.mxu0 0.0
    %649 = vmatpush1.msra.mxu0 0.0
    %650 = vmatprep.subr.mxu0 0.0
    %651 = vmatpush1.msra.mxu0 0.0
    %652 = vmatprep.mubr.f32.mxu0 0.0
    %653 = vmatmul.mubr.f32.gmra.mrb[0].mxu0 %v572
    %v654 = vpop.f32.mrb[0].mxu0
    %v655 = vadd.f32 0.0, %v654
    %v656 = vpop.f32.mrb[0].mxu0
    %657 = vmatprep.mubr.f32.mxu0 0.0
    %658 = vmatmul.mubr.f32.gmra.mrb[0].mxu0 %v573
    %v659 = vpop.f32.mrb[0].mxu0
    %v660 = vadd.f32 0.0, %v659
    %v661 = vpop.f32.mrb[0].mxu0
    %662 = vmatprep.mubr.f32.mxu0 0.0
    %663 = vmatmul.mubr.f32.gmra.mrb[0].mxu0 %v574
    %v664 = vpop.f32.mrb[0].mxu0
    %v665 = vadd.f32 0.0, %v664
    %v666 = vpop.f32.mrb[0].mxu0
    %667 = vmatprep.mubr.f32.mxu0 0.0
    %668 = vmatmul.mubr.f32.gmra.mrb[0].mxu0 %v575
    %v669 = vpop.f32.mrb[0].mxu0
    %v670 = vadd.f32 0.0, %v669
    %v671 = vpop.f32.mrb[0].mxu0
    %672 = vmatprep.mubr.f32.mxu0 0.0
    %673 = vmatmul.mubr.f32.gmra.mrb[0].mxu0 %v576
    %v674 = vpop.f32.mrb[0].mxu0
    %v675 = vadd.f32 0.0, %v674
    %v676 = vpop.f32.mrb[0].mxu0
    %677 = vmatprep.mubr.f32.mxu0 0.0
    %678 = vmatmul.mubr.f32.gmra.mrb[0].mxu0 %v577
    %v679 = vpop.f32.mrb[0].mxu0
    %v680 = vadd.f32 0.0, %v679
    %v681 = vpop.f32.mrb[0].mxu0
    %682 = vmatprep.mubr.f32.mxu0 0.0
    %683 = vmatmul.mubr.f32.gmra.mrb[0].mxu0 %v578
    %v684 = vpop.f32.mrb[0].mxu0
    %v685 = vadd.f32 0.0, %v684
    %v686 = vpop.f32.mrb[0].mxu0
    %687 = vmatprep.mubr.f32.mxu0 0.0
    %688 = vmatmul.mubr.f32.gmra.mrb[0].mxu0 %v579
    %v689 = vpop.f32.mrb[0].mxu0
    %v690 = vadd.f32 0.0, %v689
    %v691 = vpop.f32.mrb[0].mxu0
    %692 = vmatprep.mubr.f32.mxu0 0.0
    %693 = vmatmul.mubr.f32.gmra.mrb[0].mxu0 %v580
    %v694 = vpop.f32.mrb[0].mxu0
    %v695 = vadd.f32 0.0, %v694
    %v696 = vpop.f32.mrb[0].mxu0
    %697 = vmatprep.mubr.f32.mxu0 0.0
    %698 = vmatmul.mubr.f32.gmra.mrb[0].mxu0 %v581
    %v699 = vpop.f32.mrb[0].mxu0
    %v700 = vadd.f32 0.0, %v699
    %v701 = vpop.f32.mrb[0].mxu0
    %702 = vmatprep.mubr.f32.mxu0 0.0
    %703 = vmatmul.mubr.f32.gmra.mrb[0].mxu0 %v582
    %v704 = vpop.f32.mrb[0].mxu0
    %v705 = vadd.f32 0.0, %v704
    %v706 = vpop.f32.mrb[0].mxu0
    %707 = vmatprep.mubr.f32.mxu0 0.0
    %708 = vmatmul.mubr.f32.gmra.mrb[0].mxu0 %v583
    %v709 = vpop.f32.mrb[0].mxu0
    %v710 = vadd.f32 0.0, %v709
    %v711 = vpop.f32.mrb[0].mxu0
    %712 = vmatprep.mubr.f32.mxu0 0.0
    %713 = vmatmul.mubr.f32.gmra.mrb[0].mxu0 %v584
    %v714 = vpop.f32.mrb[0].mxu0
    %v715 = vadd.f32 0.0, %v714
    %v716 = vpop.f32.mrb[0].mxu0
    %717 = vmatprep.mubr.f32.mxu0 0.0
    %718 = vmatmul.mubr.f32.gmra.mrb[0].mxu0 %v585
    %v719 = vpop.f32.mrb[0].mxu0
    %v720 = vadd.f32 0.0, %v719
    %v721 = vpop.f32.mrb[0].mxu0
    %722 = vmatprep.mubr.f32.mxu0 0.0
    %723 = vmatmul.mubr.f32.gmra.mrb[0].mxu0 %v586
    %v724 = vpop.f32.mrb[0].mxu0
    %v725 = vadd.f32 0.0, %v724
    %v726 = vpop.f32.mrb[0].mxu0
    %727 = vmatprep.mubr.f32.mxu0 0.0
    %728 = vmatmul.mubr.f32.gmra.mrb[0].mxu0 %v587
    %v729 = vpop.f32.mrb[0].mxu0
    %v730 = vadd.f32 0.0, %v729
    %v731 = vpop.f32.mrb[0].mxu0
    %732 = vdwg.mxu0
    %v733 = vmax.f32 %v655, 0.0
    %v734 = vmax.f32 %v660, 0.0
    %v735 = vmax.f32 %v665, 0.0
    %v736 = vmax.f32 %v670, 0.0
    %v737 = vmax.f32 %v675, 0.0
    %v738 = vmax.f32 %v680, 0.0
    %v739 = vmax.f32 %v685, 0.0
    %v740 = vmax.f32 %v690, 0.0
    %v741 = vmax.f32 %v695, 0.0
    %v742 = vmax.f32 %v700, 0.0
    %v743 = vmax.f32 %v705, 0.0
    %v744 = vmax.f32 %v710, 0.0
    %v745 = vmax.f32 %v715, 0.0
    %v746 = vmax.f32 %v720, 0.0
    %v747 = vmax.f32 %v725, 0.0
    %v748 = vmax.f32 %v730, 0.0
    %s749 = scalar_lea.vmem [#allocation2], 768
    %v750 = vld [vmem:[%s749] sm:$0xff]
    %v751 = vld [vmem:[%s749 + $0x8] sm:$0xff]
    %v752 = vld [vmem:[%s749 + $0x10] sm:$0xff]
    %v753 = vld [vmem:[%s749 + $0x18] sm:$0xff]
    %v754 = vld [vmem:[%s749 + $0x20] sm:$0xff]
    %v755 = vld [vmem:[%s749 + $0x28] sm:$0xff]
    %v756 = vld [vmem:[%s749 + $0x30] sm:$0xff]
    %v757 = vld [vmem:[%s749 + $0x38] sm:$0xff]
    %v758 = vld [vmem:[%s749 + $0x40] sm:$0xff]
    %v759 = vld [vmem:[%s749 + $0x48] sm:$0xff]
    %v760 = vld [vmem:[%s749 + $0x50] sm:$0xff]
    %v761 = vld [vmem:[%s749 + $0x58] sm:$0xff]
    %v762 = vld [vmem:[%s749 + $0x60] sm:$0xff]
    %v763 = vld [vmem:[%s749 + $0x68] sm:$0xff]
    %v764 = vld [vmem:[%s749 + $0x70] sm:$0xff]
    %v765 = vld [vmem:[%s749 + $0x78] sm:$0xff]
    %766 = vmatprep.subr.mxu0 0.0
    %767 = vmatpush1.msra.mxu0 %v733
    %768 = vmatprep.subr.mxu0 0.0
    %769 = vmatpush1.msra.mxu0 %v734
    %770 = vmatprep.subr.mxu0 0.0
    %771 = vmatpush1.msra.mxu0 %v735
    %772 = vmatprep.subr.mxu0 0.0
    %773 = vmatpush1.msra.mxu0 %v736
    %774 = vmatprep.subr.mxu0 0.0
    %775 = vmatpush1.msra.mxu0 %v737
    %776 = vmatprep.subr.mxu0 0.0
    %777 = vmatpush1.msra.mxu0 %v738
    %778 = vmatprep.subr.mxu0 0.0
    %779 = vmatpush1.msra.mxu0 %v739
    %780 = vmatprep.subr.mxu0 0.0
    %781 = vmatpush1.msra.mxu0 %v740
    %782 = vmatprep.subr.mxu0 0.0
    %783 = vmatpush1.msra.mxu0 %v741
    %784 = vmatprep.subr.mxu0 0.0
    %785 = vmatpush1.msra.mxu0 %v742
    %786 = vmatprep.subr.mxu0 0.0
    %787 = vmatpush1.msra.mxu0 %v743
    %788 = vmatprep.subr.mxu0 0.0
    %789 = vmatpush1.msra.mxu0 %v744
    %790 = vmatprep.subr.mxu0 0.0
    %791 = vmatpush1.msra.mxu0 %v745
    %792 = vmatprep.subr.mxu0 0.0
    %793 = vmatpush1.msra.mxu0 %v746
    %794 = vmatprep.subr.mxu0 0.0
    %795 = vmatpush1.msra.mxu0 %v747
    %796 = vmatprep.subr.mxu0 0.0
    %797 = vmatpush1.msra.mxu0 %v748
    %798 = vmatprep.subr.mxu0 0.0
    %799 = vmatpush1.msra.mxu0 0.0
    %800 = vmatprep.subr.mxu0 0.0
    %801 = vmatpush1.msra.mxu0 0.0
    %802 = vmatprep.subr.mxu0 0.0
    %803 = vmatpush1.msra.mxu0 0.0
    %804 = vmatprep.subr.mxu0 0.0
    %805 = vmatpush1.msra.mxu0 0.0
    %806 = vmatprep.subr.mxu0 0.0
    %807 = vmatpush1.msra.mxu0 0.0
    %808 = vmatprep.subr.mxu0 0.0
    %809 = vmatpush1.msra.mxu0 0.0
    %810 = vmatprep.subr.mxu0 0.0
    %811 = vmatpush1.msra.mxu0 0.0
    %812 = vmatprep.subr.mxu0 0.0
    %813 = vmatpush1.msra.mxu0 0.0
    %814 = vmatprep.subr.mxu0 0.0
    %815 = vmatpush1.msra.mxu0 0.0
    %816 = vmatprep.subr.mxu0 0.0
    %817 = vmatpush1.msra.mxu0 0.0
    %818 = vmatprep.subr.mxu0 0.0
    %819 = vmatpush1.msra.mxu0 0.0
    %820 = vmatprep.subr.mxu0 0.0
    %821 = vmatpush1.msra.mxu0 0.0
    %822 = vmatprep.subr.mxu0 0.0
    %823 = vmatpush1.msra.mxu0 0.0
    %824 = vmatprep.subr.mxu0 0.0
    %825 = vmatpush1.msra.mxu0 0.0
    %826 = vmatprep.subr.mxu0 0.0
    %827 = vmatpush1.msra.mxu0 0.0
    %828 = vmatprep.subr.mxu0 0.0
    %829 = vmatpush1.msra.mxu0 0.0
    %830 = vmatprep.mubr.f32.mxu0 0.0
    %831 = vmatmul.mubr.f32.gmra.mrb[0].mxu0 %v750
    %v832 = vpop.f32.mrb[0].mxu0
    %v833 = vadd.f32 0.0, %v832
    %v834 = vpop.f32.mrb[0].mxu0
    %835 = vmatprep.mubr.f32.mxu0 0.0
    %836 = vmatmul.mubr.f32.gmra.mrb[0].mxu0 %v751
    %v837 = vpop.f32.mrb[0].mxu0
    %v838 = vadd.f32 0.0, %v837
    %v839 = vpop.f32.mrb[0].mxu0
    %840 = vmatprep.mubr.f32.mxu0 0.0
    %841 = vmatmul.mubr.f32.gmra.mrb[0].mxu0 %v752
    %v842 = vpop.f32.mrb[0].mxu0
    %v843 = vadd.f32 0.0, %v842
    %v844 = vpop.f32.mrb[0].mxu0
    %845 = vmatprep.mubr.f32.mxu0 0.0
    %846 = vmatmul.mubr.f32.gmra.mrb[0].mxu0 %v753
    %v847 = vpop.f32.mrb[0].mxu0
    %v848 = vadd.f32 0.0, %v847
    %v849 = vpop.f32.mrb[0].mxu0
    %850 = vmatprep.mubr.f32.mxu0 0.0
    %851 = vmatmul.mubr.f32.gmra.mrb[0].mxu0 %v754
    %v852 = vpop.f32.mrb[0].mxu0
    %v853 = vadd.f32 0.0, %v852
    %v854 = vpop.f32.mrb[0].mxu0
    %855 = vmatprep.mubr.f32.mxu0 0.0
    %856 = vmatmul.mubr.f32.gmra.mrb[0].mxu0 %v755
    %v857 = vpop.f32.mrb[0].mxu0
    %v858 = vadd.f32 0.0, %v857
    %v859 = vpop.f32.mrb[0].mxu0
    %860 = vmatprep.mubr.f32.mxu0 0.0
    %861 = vmatmul.mubr.f32.gmra.mrb[0].mxu0 %v756
    %v862 = vpop.f32.mrb[0].mxu0
    %v863 = vadd.f32 0.0, %v862
    %v864 = vpop.f32.mrb[0].mxu0
    %865 = vmatprep.mubr.f32.mxu0 0.0
    %866 = vmatmul.mubr.f32.gmra.mrb[0].mxu0 %v757
    %v867 = vpop.f32.mrb[0].mxu0
    %v868 = vadd.f32 0.0, %v867
    %v869 = vpop.f32.mrb[0].mxu0
    %870 = vmatprep.mubr.f32.mxu0 0.0
    %871 = vmatmul.mubr.f32.gmra.mrb[0].mxu0 %v758
    %v872 = vpop.f32.mrb[0].mxu0
    %v873 = vadd.f32 0.0, %v872
    %v874 = vpop.f32.mrb[0].mxu0
    %875 = vmatprep.mubr.f32.mxu0 0.0
    %876 = vmatmul.mubr.f32.gmra.mrb[0].mxu0 %v759
    %v877 = vpop.f32.mrb[0].mxu0
    %v878 = vadd.f32 0.0, %v877
    %v879 = vpop.f32.mrb[0].mxu0
    %880 = vmatprep.mubr.f32.mxu0 0.0
    %881 = vmatmul.mubr.f32.gmra.mrb[0].mxu0 %v760
    %v882 = vpop.f32.mrb[0].mxu0
    %v883 = vadd.f32 0.0, %v882
    %v884 = vpop.f32.mrb[0].mxu0
    %885 = vmatprep.mubr.f32.mxu0 0.0
    %886 = vmatmul.mubr.f32.gmra.mrb[0].mxu0 %v761
    %v887 = vpop.f32.mrb[0].mxu0
    %v888 = vadd.f32 0.0, %v887
    %v889 = vpop.f32.mrb[0].mxu0
    %890 = vmatprep.mubr.f32.mxu0 0.0
    %891 = vmatmul.mubr.f32.gmra.mrb[0].mxu0 %v762
    %v892 = vpop.f32.mrb[0].mxu0
    %v893 = vadd.f32 0.0, %v892
    %v894 = vpop.f32.mrb[0].mxu0
    %895 = vmatprep.mubr.f32.mxu0 0.0
    %896 = vmatmul.mubr.f32.gmra.mrb[0].mxu0 %v763
    %v897 = vpop.f32.mrb[0].mxu0
    %v898 = vadd.f32 0.0, %v897
    %v899 = vpop.f32.mrb[0].mxu0
    %900 = vmatprep.mubr.f32.mxu0 0.0
    %901 = vmatmul.mubr.f32.gmra.mrb[0].mxu0 %v764
    %v902 = vpop.f32.mrb[0].mxu0
    %v903 = vadd.f32 0.0, %v902
    %v904 = vpop.f32.mrb[0].mxu0
    %905 = vmatprep.mubr.f32.mxu0 0.0
    %906 = vmatmul.mubr.f32.gmra.mrb[0].mxu0 %v765
    %v907 = vpop.f32.mrb[0].mxu0
    %v908 = vadd.f32 0.0, %v907
    %v909 = vpop.f32.mrb[0].mxu0
    %910 = vdwg.mxu0
    %v911 = vmax.f32 %v833, 0.0
    %v912 = vmax.f32 %v838, 0.0
    %v913 = vmax.f32 %v843, 0.0
    %v914 = vmax.f32 %v848, 0.0
    %v915 = vmax.f32 %v853, 0.0
    %v916 = vmax.f32 %v858, 0.0
    %v917 = vmax.f32 %v863, 0.0
    %v918 = vmax.f32 %v868, 0.0
    %v919 = vmax.f32 %v873, 0.0
    %v920 = vmax.f32 %v878, 0.0
    %v921 = vmax.f32 %v883, 0.0
    %v922 = vmax.f32 %v888, 0.0
    %v923 = vmax.f32 %v893, 0.0
    %v924 = vmax.f32 %v898, 0.0
    %v925 = vmax.f32 %v903, 0.0
    %v926 = vmax.f32 %v908, 0.0
    %s927 = scalar_lea.vmem [#allocation2], 896
    %v928 = vld [vmem:[%s927] sm:$0xff]
    %v929 = vld [vmem:[%s927 + $0x8] sm:$0xff]
    %v930 = vld [vmem:[%s927 + $0x10] sm:$0xff]
    %v931 = vld [vmem:[%s927 + $0x18] sm:$0xff]
    %v932 = vld [vmem:[%s927 + $0x20] sm:$0xff]
    %v933 = vld [vmem:[%s927 + $0x28] sm:$0xff]
    %v934 = vld [vmem:[%s927 + $0x30] sm:$0xff]
    %v935 = vld [vmem:[%s927 + $0x38] sm:$0xff]
    %v936 = vld [vmem:[%s927 + $0x40] sm:$0xff]
    %v937 = vld [vmem:[%s927 + $0x48] sm:$0xff]
    %v938 = vld [vmem:[%s927 + $0x50] sm:$0xff]
    %v939 = vld [vmem:[%s927 + $0x58] sm:$0xff]
    %v940 = vld [vmem:[%s927 + $0x60] sm:$0xff]
    %v941 = vld [vmem:[%s927 + $0x68] sm:$0xff]
    %v942 = vld [vmem:[%s927 + $0x70] sm:$0xff]
    %v943 = vld [vmem:[%s927 + $0x78] sm:$0xff]
    %944 = vmatprep.subr.mxu0 0.0
    %945 = vmatpush1.msra.mxu0 %v911
    %946 = vmatprep.subr.mxu0 0.0
    %947 = vmatpush1.msra.mxu0 %v912
    %948 = vmatprep.subr.mxu0 0.0
    %949 = vmatpush1.msra.mxu0 %v913
    %950 = vmatprep.subr.mxu0 0.0
    %951 = vmatpush1.msra.mxu0 %v914
    %952 = vmatprep.subr.mxu0 0.0
    %953 = vmatpush1.msra.mxu0 %v915
    %954 = vmatprep.subr.mxu0 0.0
    %955 = vmatpush1.msra.mxu0 %v916
    %956 = vmatprep.subr.mxu0 0.0
    %957 = vmatpush1.msra.mxu0 %v917
    %958 = vmatprep.subr.mxu0 0.0
    %959 = vmatpush1.msra.mxu0 %v918
    %960 = vmatprep.subr.mxu0 0.0
    %961 = vmatpush1.msra.mxu0 %v919
    %962 = vmatprep.subr.mxu0 0.0
    %963 = vmatpush1.msra.mxu0 %v920
    %964 = vmatprep.subr.mxu0 0.0
    %965 = vmatpush1.msra.mxu0 %v921
    %966 = vmatprep.subr.mxu0 0.0
    %967 = vmatpush1.msra.mxu0 %v922
    %968 = vmatprep.subr.mxu0 0.0
    %969 = vmatpush1.msra.mxu0 %v923
    %970 = vmatprep.subr.mxu0 0.0
    %971 = vmatpush1.msra.mxu0 %v924
    %972 = vmatprep.subr.mxu0 0.0
    %973 = vmatpush1.msra.mxu0 %v925
    %974 = vmatprep.subr.mxu0 0.0
    %975 = vmatpush1.msra.mxu0 %v926
    %976 = vmatprep.subr.mxu0 0.0
    %977 = vmatpush1.msra.mxu0 0.0
    %978 = vmatprep.subr.mxu0 0.0
    %979 = vmatpush1.msra.mxu0 0.0
    %980 = vmatprep.subr.mxu0 0.0
    %981 = vmatpush1.msra.mxu0 0.0
    %982 = vmatprep.subr.mxu0 0.0
    %983 = vmatpush1.msra.mxu0 0.0
    %984 = vmatprep.subr.mxu0 0.0
    %985 = vmatpush1.msra.mxu0 0.0
    %986 = vmatprep.subr.mxu0 0.0
    %987 = vmatpush1.msra.mxu0 0.0
    %988 = vmatprep.subr.mxu0 0.0
    %989 = vmatpush1.msra.mxu0 0.0
    %990 = vmatprep.subr.mxu0 0.0
    %991 = vmatpush1.msra.mxu0 0.0
    %992 = vmatprep.subr.mxu0 0.0
    %993 = vmatpush1.msra.mxu0 0.0
    %994 = vmatprep.subr.mxu0 0.0
    %995 = vmatpush1.msra.mxu0 0.0
    %996 = vmatprep.subr.mxu0 0.0
    %997 = vmatpush1.msra.mxu0 0.0
    %998 = vmatprep.subr.mxu0 0.0
    %999 = vmatpush1.msra.mxu0 0.0
    %1000 = vmatprep.subr.mxu0 0.0
    %1001 = vmatpush1.msra.mxu0 0.0
    %1002 = vmatprep.subr.mxu0 0.0
    %1003 = vmatpush1.msra.mxu0 0.0
    %1004 = vmatprep.subr.mxu0 0.0
    %1005 = vmatpush1.msra.mxu0 0.0
    %1006 = vmatprep.subr.mxu0 0.0
    %1007 = vmatpush1.msra.mxu0 0.0
    %1008 = vmatprep.mubr.f32.mxu0 0.0
    %1009 = vmatmul.mubr.f32.gmra.mrb[0].mxu0 %v928
    %v1010 = vpop.f32.mrb[0].mxu0
    %v1011 = vadd.f32 0.0, %v1010
    %v1012 = vpop.f32.mrb[0].mxu0
    %1013 = vmatprep.mubr.f32.mxu0 0.0
    %1014 = vmatmul.mubr.f32.gmra.mrb[0].mxu0 %v929
    %v1015 = vpop.f32.mrb[0].mxu0
    %v1016 = vadd.f32 0.0, %v1015
    %v1017 = vpop.f32.mrb[0].mxu0
    %1018 = vmatprep.mubr.f32.mxu0 0.0
    %1019 = vmatmul.mubr.f32.gmra.mrb[0].mxu0 %v930
    %v1020 = vpop.f32.mrb[0].mxu0
    %v1021 = vadd.f32 0.0, %v1020
    %v1022 = vpop.f32.mrb[0].mxu0
    %1023 = vmatprep.mubr.f32.mxu0 0.0
    %1024 = vmatmul.mubr.f32.gmra.mrb[0].mxu0 %v931
    %v1025 = vpop.f32.mrb[0].mxu0
    %v1026 = vadd.f32 0.0, %v1025
    %v1027 = vpop.f32.mrb[0].mxu0
    %1028 = vmatprep.mubr.f32.mxu0 0.0
    %1029 = vmatmul.mubr.f32.gmra.mrb[0].mxu0 %v932
    %v1030 = vpop.f32.mrb[0].mxu0
    %v1031 = vadd.f32 0.0, %v1030
    %v1032 = vpop.f32.mrb[0].mxu0
    %1033 = vmatprep.mubr.f32.mxu0 0.0
    %1034 = vmatmul.mubr.f32.gmra.mrb[0].mxu0 %v933
    %v1035 = vpop.f32.mrb[0].mxu0
    %v1036 = vadd.f32 0.0, %v1035
    %v1037 = vpop.f32.mrb[0].mxu0
    %1038 = vmatprep.mubr.f32.mxu0 0.0
    %1039 = vmatmul.mubr.f32.gmra.mrb[0].mxu0 %v934
    %v1040 = vpop.f32.mrb[0].mxu0
    %v1041 = vadd.f32 0.0, %v1040
    %v1042 = vpop.f32.mrb[0].mxu0
    %1043 = vmatprep.mubr.f32.mxu0 0.0
    %1044 = vmatmul.mubr.f32.gmra.mrb[0].mxu0 %v935
    %v1045 = vpop.f32.mrb[0].mxu0
    %v1046 = vadd.f32 0.0, %v1045
    %v1047 = vpop.f32.mrb[0].mxu0
    %1048 = vmatprep.mubr.f32.mxu0 0.0
    %1049 = vmatmul.mubr.f32.gmra.mrb[0].mxu0 %v936
    %v1050 = vpop.f32.mrb[0].mxu0
    %v1051 = vadd.f32 0.0, %v1050
    %v1052 = vpop.f32.mrb[0].mxu0
    %1053 = vmatprep.mubr.f32.mxu0 0.0
    %1054 = vmatmul.mubr.f32.gmra.mrb[0].mxu0 %v937
    %v1055 = vpop.f32.mrb[0].mxu0
    %v1056 = vadd.f32 0.0, %v1055
    %v1057 = vpop.f32.mrb[0].mxu0
    %1058 = vmatprep.mubr.f32.mxu0 0.0
    %1059 = vmatmul.mubr.f32.gmra.mrb[0].mxu0 %v938
    %v1060 = vpop.f32.mrb[0].mxu0
    %v1061 = vadd.f32 0.0, %v1060
    %v1062 = vpop.f32.mrb[0].mxu0
    %1063 = vmatprep.mubr.f32.mxu0 0.0
    %1064 = vmatmul.mubr.f32.gmra.mrb[0].mxu0 %v939
    %v1065 = vpop.f32.mrb[0].mxu0
    %v1066 = vadd.f32 0.0, %v1065
    %v1067 = vpop.f32.mrb[0].mxu0
    %1068 = vmatprep.mubr.f32.mxu0 0.0
    %1069 = vmatmul.mubr.f32.gmra.mrb[0].mxu0 %v940
    %v1070 = vpop.f32.mrb[0].mxu0
    %v1071 = vadd.f32 0.0, %v1070
    %v1072 = vpop.f32.mrb[0].mxu0
    %1073 = vmatprep.mubr.f32.mxu0 0.0
    %1074 = vmatmul.mubr.f32.gmra.mrb[0].mxu0 %v941
    %v1075 = vpop.f32.mrb[0].mxu0
    %v1076 = vadd.f32 0.0, %v1075
    %v1077 = vpop.f32.mrb[0].mxu0
    %1078 = vmatprep.mubr.f32.mxu0 0.0
    %1079 = vmatmul.mubr.f32.gmra.mrb[0].mxu0 %v942
    %v1080 = vpop.f32.mrb[0].mxu0
    %v1081 = vadd.f32 0.0, %v1080
    %v1082 = vpop.f32.mrb[0].mxu0
    %1083 = vmatprep.mubr.f32.mxu0 0.0
    %1084 = vmatmul.mubr.f32.gmra.mrb[0].mxu0 %v943
    %v1085 = vpop.f32.mrb[0].mxu0
    %v1086 = vadd.f32 0.0, %v1085
    %v1087 = vpop.f32.mrb[0].mxu0
    %1088 = vdwg.mxu0
    %1089 = vmatprep.subr.mxu0 0.0
    %1090 = vmatpush1.msra.mxu0 %v1011
    %1091 = vmatprep.subr.mxu0 0.0
    %1092 = vmatpush1.msra.mxu0 %v1016
    %1093 = vmatprep.subr.mxu0 0.0
    %1094 = vmatpush1.msra.mxu0 %v1021
    %1095 = vmatprep.subr.mxu0 0.0
    %1096 = vmatpush1.msra.mxu0 %v1026
    %1097 = vmatprep.subr.mxu0 0.0
    %1098 = vmatpush1.msra.mxu0 %v1031
    %1099 = vmatprep.subr.mxu0 0.0
    %1100 = vmatpush1.msra.mxu0 %v1036
    %1101 = vmatprep.subr.mxu0 0.0
    %1102 = vmatpush1.msra.mxu0 %v1041
    %1103 = vmatprep.subr.mxu0 0.0
    %1104 = vmatpush1.msra.mxu0 %v1046
    %1105 = vmatprep.subr.mxu0 0.0
    %1106 = vmatpush1.msra.mxu0 %v1051
    %1107 = vmatprep.subr.mxu0 0.0
    %1108 = vmatpush1.msra.mxu0 %v1056
    %1109 = vmatprep.subr.mxu0 0.0
    %1110 = vmatpush1.msra.mxu0 %v1061
    %1111 = vmatprep.subr.mxu0 0.0
    %1112 = vmatpush1.msra.mxu0 %v1066
    %1113 = vmatprep.subr.mxu0 0.0
    %1114 = vmatpush1.msra.mxu0 %v1071
    %1115 = vmatprep.subr.mxu0 0.0
    %1116 = vmatpush1.msra.mxu0 %v1076
    %1117 = vmatprep.subr.mxu0 0.0
    %1118 = vmatpush1.msra.mxu0 %v1081
    %1119 = vmatprep.subr.mxu0 0.0
    %1120 = vmatpush1.msra.mxu0 %v1086
    %1121 = vmatprep.subr.mxu0 0.0
    %1122 = vmatpush1.msra.mxu0 0.0
    %1123 = vmatprep.subr.mxu0 0.0
    %1124 = vmatpush1.msra.mxu0 0.0
    %1125 = vmatprep.subr.mxu0 0.0
    %1126 = vmatpush1.msra.mxu0 0.0
    %1127 = vmatprep.subr.mxu0 0.0
    %1128 = vmatpush1.msra.mxu0 0.0
    %1129 = vmatprep.subr.mxu0 0.0
    %1130 = vmatpush1.msra.mxu0 0.0
    %1131 = vmatprep.subr.mxu0 0.0
    %1132 = vmatpush1.msra.mxu0 0.0
    %1133 = vmatprep.subr.mxu0 0.0
    %1134 = vmatpush1.msra.mxu0 0.0
    %1135 = vmatprep.subr.mxu0 0.0
    %1136 = vmatpush1.msra.mxu0 0.0
    %1137 = vmatprep.subr.mxu0 0.0
    %1138 = vmatpush1.msra.mxu0 0.0
    %1139 = vmatprep.subr.mxu0 0.0
    %1140 = vmatpush1.msra.mxu0 0.0
    %1141 = vmatprep.subr.mxu0 0.0
    %1142 = vmatpush1.msra.mxu0 0.0
    %1143 = vmatprep.subr.mxu0 0.0
    %1144 = vmatpush1.msra.mxu0 0.0
    %1145 = vmatprep.subr.mxu0 0.0
    %1146 = vmatpush1.msra.mxu0 0.0
    %1147 = vmatprep.subr.mxu0 0.0
    %1148 = vmatpush1.msra.mxu0 0.0
    %1149 = vmatprep.subr.mxu0 0.0
    %1150 = vmatpush1.msra.mxu0 0.0
    %1151 = vmatprep.subr.mxu0 0.0
    %1152 = vmatpush1.msra.mxu0 0.0
    %1153 = vmatprep.mubr.f32.mxu0 0.0
    %1154 = vmatmul.mubr.f32.gmra.mrb[0].mxu0 %v390
    %v1155 = vpop.f32.mrb[0].mxu0
    %v1156 = vadd.f32 0.0, %v1155
    %v1157 = vpop.f32.mrb[0].mxu0
    %1158 = vdwg.mxu0
    %1159 = vst [vmem:[%s2] sm:$0xff] %v1156
    // Predicated region
    $region14: #{deeponet_forward.1} parent=1 // pred_check
      _
    $region15: #{deeponet_forward.1} parent=1 // pred_check_branch
      %1161 = sbr.rel (0) target = $region17
    $region16: #{deeponet_forward.1} parent=1 // pred_region
      _
    $region17: #{deeponet_forward.1} parent=1 // pred_fallthru
      _
    // Predicated region
    $region18: #{deeponet_forward.1} parent=1 // pred_check
      _
    $region19: #{deeponet_forward.1} parent=1 // pred_check_branch
      %1163 = sbr.rel (0) target = $region21
    $region20: #{deeponet_forward.1} parent=1 // pred_region
      _
    $region21: #{deeponet_forward.1} parent=1 // pred_fallthru
      _
    %1164 = vsyncpa [#allocation3], 1

</llo_original>
